<compile_context>
chip_gen: v7x
topology: tpu7x:2x2x1
jax: 0.10.0
libtpu: 0.0.40
codegen_flags: <defaults>
</compile_context>

<pallas_src>
import math

import jax
import jax.numpy as jnp
from jax import lax
from jax.experimental import pallas as pl
from jax.experimental.pallas import tpu as pltpu


def _sweep_kernel(x_ref, kf_ref, kb_ref, o_ref, rowbuf):
    """Forward + backward directional sweep over one batch element.

    Shapes (batch dim already squeezed away by the BlockSpec):
      x_ref, o_ref   : (S, L, C)   S = sweep/recurrence axis, L = conv axis
      kf_ref, kb_ref : (k, C, C)   per-tap channel-mixing weights
      rowbuf         : (L + 2*pad, C) zero-halo staging buffer
    """
    S, L, C = o_ref.shape
    k = kf_ref.shape[0]
    pad = (k - 1) // 2

    # The output block doubles as the sweep state; it stays in VMEM for the
    # whole recurrence and is written back to HBM once per grid step.
    o_ref[...] = x_ref[...]

    # Zero the staging buffer once; only the halo has to stay zero, the
    # interior is overwritten every step.
    rowbuf[...] = jnp.zeros_like(rowbuf)

    # Hoist the (C, C) weight tiles out of the recurrence loops so they stay
    # resident for all 2*S serially-dependent steps.
    kf_taps = [kf_ref[t] for t in range(k)]
    kb_taps = [kb_ref[t] for t in range(k)]

    def line_msg(prev_line, taps):
        # prev_line: (L, C).  Stage it into the zero-halo scratch, then read
        # the k shifted windows as static slices -> no per-tap zeros/concat.
        rowbuf[pad:pad + L, :] = prev_line
        acc = jnp.dot(rowbuf[0:L, :], taps[0],
                      preferred_element_type=jnp.float32)
        for t in range(1, k):
            acc = acc + jnp.dot(rowbuf[t:t + L, :], taps[t],
                                preferred_element_type=jnp.float32)
        return jnp.maximum(acc, 0.0)

    # forward sweep (e.g. top -> down): x[i] += relu(conv(x[i-1]))
    def fwd_body(i, carry):
        o_ref[i] = o_ref[i] + line_msg(o_ref[i - 1], kf_taps)
        return carry

    lax.fori_loop(1, S, fwd_body, 0)

    # backward sweep (e.g. down -> top): x[i] += relu(conv(x[i+1]))
    def bwd_body(t, carry):
        i = S - 2 - t
        o_ref[i] = o_ref[i] + line_msg(o_ref[i + 1], kb_taps)
        return carry

    lax.fori_loop(0, S - 1, bwd_body, 0)


def _sweep_pallas(x_bslc, kf, kb):
    """Runs the fwd+bwd sweep pair over axis 1 of x_bslc = (B, S, L, C)."""
    B, S, L, C = x_bslc.shape
    k = kf.shape[0]
    pad = (k - 1) // 2
    return pl.pallas_call(
        _sweep_kernel,
        out_shape=jax.ShapeDtypeStruct((B, S, L, C), jnp.float32),
        grid=(B,),
        in_specs=[
            pl.BlockSpec((None, S, L, C), lambda b: (b, 0, 0, 0)),
            pl.BlockSpec((k, C, C), lambda b: (0, 0, 0)),
            pl.BlockSpec((k, C, C), lambda b: (0, 0, 0)),
        ],
        out_specs=pl.BlockSpec((None, S, L, C), lambda b: (b, 0, 0, 0)),
        scratch_shapes=[pltpu.VMEM((L + 2 * pad, C), jnp.float32)],
        input_output_aliases={0: 0},
        compiler_params=pltpu.CompilerParams(
            dimension_semantics=("parallel",)),
    )(x_bslc, kf, kb)


def scnn_forward(x_nchw, ktd, kdt, klr, krl):
    """Full SCNN forward.  x_nchw: (B, C, H, W) float32 -> (B, C, H, W)."""
    x = jnp.transpose(x_nchw, (0, 2, 3, 1))          # NHWC: (B, H, W, C)
    # vertical sweeps: recurrence over H, conv (length w) along W
    x = _sweep_pallas(x, ktd, kdt)
    # horizontal sweeps: recurrence over W, conv (length h) along H
    xt = jnp.transpose(x, (0, 2, 1, 3))              # (B, W, H, C)
    xt = _sweep_pallas(xt, klr, krl)
    # fold (B,W,H,C) -> (B,H,W,C) -> (B,C,H,W) into a single permute
    return jnp.transpose(xt, (0, 3, 2, 1))


# ----------------------------- pure-JAX reference -----------------------------
def _sweep_ref(x, kf, kb):
    B, S, L, C = x.shape
    k = kf.shape[0]
    pad = (k - 1) // 2

    def conv_line(row, kref):
        padded = jnp.pad(row, ((0, 0), (pad, pad), (0, 0)))
        acc = jnp.zeros_like(row)
        for kw in range(k):
            acc = acc + jnp.einsum('blc,cd->bld', padded[:, kw:kw + L, :],
                                   kref[kw],
                                   precision=lax.Precision.HIGHEST)
        return acc

    for i in range(1, S):
        x = x.at[:, i].add(jnp.maximum(conv_line(x[:, i - 1], kf), 0.0))
    for i in range(S - 2, -1, -1):
        x = x.at[:, i].add(jnp.maximum(conv_line(x[:, i + 1], kb), 0.0))
    return x


def scnn_forward_ref(x_nchw, ktd, kdt, klr, krl):
    x = jnp.transpose(x_nchw, (0, 2, 3, 1))
    x = _sweep_ref(x, ktd, kdt)
    xt = jnp.transpose(x, (0, 2, 1, 3))
    xt = _sweep_ref(xt, klr, krl)
    x = jnp.transpose(xt, (0, 2, 1, 3))
    return jnp.transpose(x, (0, 3, 1, 2))


# ----------------------------------- main -------------------------------------
if __name__ == "__main__":
    B, C, H, W = 2, 8, 16, 16
    w = h = 3  # odd, as required by SCNN

    key = jax.random.PRNGKey(0)
    kx, k1, k2, k3, k4 = jax.random.split(key, 5)

    x = jax.random.normal(kx, (B, C, H, W), dtype=jnp.float32)

    # kaiming_uniform_(a=sqrt(5)) on a (C, 1, k, C) torch weight ->
    # bound = 1/sqrt(fan_in), fan_in = 1 * k * C.  Stored as (k, C_in, C_out),
    # i.e. kref[kw, ci, co] == torch_kernel[co, 0, kw, ci].
    bound_w = 1.0 / math.sqrt(1 * w * C)
    bound_h = 1.0 / math.sqrt(1 * h * C)
    ktd = jax.random.uniform(k1, (w, C, C), jnp.float32, -bound_w, bound_w)
    kdt = jax.random.uniform(k2, (w, C, C), jnp.float32, -bound_w, bound_w)
    klr = jax.random.uniform(k3, (h, C, C), jnp.float32, -bound_h, bound_h)
    krl = jax.random.uniform(k4, (h, C, C), jnp.float32, -bound_h, bound_h)
    # NOTE: bias_{td,dt,lr,rl} exist in the torch module but are never used in
    # forward(), so they are intentionally omitted.

    out = jax.jit(scnn_forward)(x, ktd, kdt, klr, krl)
    out = jax.block_until_ready(out)

    ref = scnn_forward_ref(x, ktd, kdt, klr, krl)
    assert out.shape == (B, C, H, W) and out.dtype == jnp.float32
    assert jnp.allclose(out, ref, atol=2e-3, rtol=2e-3), \
        "Pallas/JAX reference mismatch"

    print("KERNEL_OK")
</pallas_src>

<mosaic_0001>
module attributes {stable_mosaic.version = 11 : i64} {
  func.func @_sweep_kernel(%arg0: i32, %arg1: memref<1x16x16x8xf32, #tpu.memory_space<vmem>>, %arg2: memref<3x8x8xf32, #tpu.memory_space<vmem>>, %arg3: memref<3x8x8xf32, #tpu.memory_space<vmem>>, %arg4: memref<1x16x16x8xf32, #tpu.memory_space<vmem>>, %arg5: memref<18x8xf32, #tpu.memory_space<vmem>>) attributes {dimension_semantics = [#tpu.dimension_semantics<parallel>], iteration_bounds = array<i64: 2>, scalar_prefetch = 0 : i64, scratch_operands = 1 : i64, tpu.core_type = #tpu.core_type<tc>, window_params = [{transform_indices = @transform_0, window_bounds = array<i64: 1, 16, 16, 8>}, {pipeline_mode = #tpu.pipeline_mode<synchronous>, transform_indices = @transform_1, window_bounds = array<i64: 3, 8, 8>}, {pipeline_mode = #tpu.pipeline_mode<synchronous>, transform_indices = @transform_2, window_bounds = array<i64: 3, 8, 8>}, {transform_indices = @transform_3, window_bounds = array<i64: 1, 16, 16, 8>}]} {
    %c0 = arith.constant 0 : index
    %c0_0 = arith.constant 0 : index
    %c0_1 = arith.constant 0 : index
    %c0_2 = arith.constant 0 : index
    %0 = vector.load %arg1[%c0, %c0_0, %c0_1, %c0_2] : memref<1x16x16x8xf32, #tpu.memory_space<vmem>>, vector<1x16x16x8xf32>
    %1 = vector.shape_cast %0 : vector<1x16x16x8xf32> to vector<16x16x8xf32>
    %c0_3 = arith.constant 0 : index
    %c0_4 = arith.constant 0 : index
    %c0_5 = arith.constant 0 : index
    %c0_6 = arith.constant 0 : index
    %2 = vector.load %arg4[%c0_3, %c0_4, %c0_5, %c0_6] : memref<1x16x16x8xf32, #tpu.memory_space<vmem>>, vector<1x16x16x8xf32>
    %3 = vector.shape_cast %2 : vector<1x16x16x8xf32> to vector<16x16x8xf32>
    %4 = vector.shape_cast %1 : vector<16x16x8xf32> to vector<1x16x16x8xf32>
    tpu.vector_store %arg4[%c0_3, %c0_4, %c0_5, %c0_6], %4 {strides = array<i32>} : memref<1x16x16x8xf32, #tpu.memory_space<vmem>>, vector<1x16x16x8xf32>,
    %cst = arith.constant 0.000000e+00 : f32
    %5 = vector.broadcast %cst : f32 to vector<18x8xf32>
    %c0_7 = arith.constant 0 : index
    %c0_8 = arith.constant 0 : index
    %6 = vector.load %arg5[%c0_7, %c0_8] : memref<18x8xf32, #tpu.memory_space<vmem>>, vector<18x8xf32>
    tpu.vector_store %arg5[%c0_7, %c0_8], %5 {strides = array<i32>} : memref<18x8xf32, #tpu.memory_space<vmem>>, vector<18x8xf32>,
    %c0_9 = arith.constant 0 : index
    %c0_10 = arith.constant 0 : index
    %c0_11 = arith.constant 0 : index
    %7 = vector.load %arg2[%c0_9, %c0_10, %c0_11] : memref<3x8x8xf32, #tpu.memory_space<vmem>>, vector<1x8x8xf32>
    %8 = vector.shape_cast %7 : vector<1x8x8xf32> to vector<8x8xf32>
    %c1 = arith.constant 1 : index
    %c0_12 = arith.constant 0 : index
    %c0_13 = arith.constant 0 : index
    %9 = vector.load %arg2[%c1, %c0_12, %c0_13] : memref<3x8x8xf32, #tpu.memory_space<vmem>>, vector<1x8x8xf32>
    %10 = vector.shape_cast %9 : vector<1x8x8xf32> to vector<8x8xf32>
    %c2 = arith.constant 2 : index
    %c0_14 = arith.constant 0 : index
    %c0_15 = arith.constant 0 : index
    %11 = vector.load %arg2[%c2, %c0_14, %c0_15] : memref<3x8x8xf32, #tpu.memory_space<vmem>>, vector<1x8x8xf32>
    %12 = vector.shape_cast %11 : vector<1x8x8xf32> to vector<8x8xf32>
    %c0_16 = arith.constant 0 : index
    %c0_17 = arith.constant 0 : index
    %c0_18 = arith.constant 0 : index
    %13 = vector.load %arg3[%c0_16, %c0_17, %c0_18] : memref<3x8x8xf32, #tpu.memory_space<vmem>>, vector<1x8x8xf32>
    %14 = vector.shape_cast %13 : vector<1x8x8xf32> to vector<8x8xf32>
    %c1_19 = arith.constant 1 : index
    %c0_20 = arith.constant 0 : index
    %c0_21 = arith.constant 0 : index
    %15 = vector.load %arg3[%c1_19, %c0_20, %c0_21] : memref<3x8x8xf32, #tpu.memory_space<vmem>>, vector<1x8x8xf32>
    %16 = vector.shape_cast %15 : vector<1x8x8xf32> to vector<8x8xf32>
    %c2_22 = arith.constant 2 : index
    %c0_23 = arith.constant 0 : index
    %c0_24 = arith.constant 0 : index
    %17 = vector.load %arg3[%c2_22, %c0_23, %c0_24] : memref<3x8x8xf32, #tpu.memory_space<vmem>>, vector<1x8x8xf32>
    %18 = vector.shape_cast %17 : vector<1x8x8xf32> to vector<8x8xf32>
    %c1_i32 = arith.constant 1 : i32
    %c15_i32 = arith.constant 15 : i32
    %19 = arith.addi %c1_i32, %c15_i32 : i32
    %c1_i32_25 = arith.constant 1 : i32
    scf.for %arg6 = %c1_i32 to %19 step %c1_i32_25  : i32 {
      %c0_30 = arith.constant 0 : index
      %21 = arith.index_cast %arg6 : i32 to index
      %c0_31 = arith.constant 0 : index
      %c0_32 = arith.constant 0 : index
      %22 = vector.load %arg4[%c0_30, %21, %c0_31, %c0_32] : memref<1x16x16x8xf32, #tpu.memory_space<vmem>>, vector<1x1x16x8xf32>
      %23 = vector.shape_cast %22 : vector<1x1x16x8xf32> to vector<16x8xf32>
      %c1_i32_33 = arith.constant 1 : i32
      %24 = arith.subi %arg6, %c1_i32_33 : i32
      %c0_34 = arith.constant 0 : index
      %25 = arith.index_cast %24 : i32 to index
      %c0_35 = arith.constant 0 : index
      %c0_36 = arith.constant 0 : index
      %26 = vector.load %arg4[%c0_34, %25, %c0_35, %c0_36] : memref<1x16x16x8xf32, #tpu.memory_space<vmem>>, vector<1x1x16x8xf32>
      %27 = vector.shape_cast %26 : vector<1x1x16x8xf32> to vector<16x8xf32>
      %c1_37 = arith.constant 1 : index
      %c0_38 = arith.constant 0 : index
      %28 = vector.load %arg5[%c1_37, %c0_38] : memref<18x8xf32, #tpu.memory_space<vmem>>, vector<16x8xf32>
      tpu.vector_store %arg5[%c1_37, %c0_38], %27 {strides = array<i32>} : memref<18x8xf32, #tpu.memory_space<vmem>>, vector<16x8xf32>,
      %c0_39 = arith.constant 0 : index
      %c0_40 = arith.constant 0 : index
      %29 = vector.load %arg5[%c0_39, %c0_40] : memref<18x8xf32, #tpu.memory_space<vmem>>, vector<16x8xf32>
      %cst_41 = arith.constant dense<0.000000e+00> : vector<16x8xf32>
      %30 = tpu.matmul %29, %8, %cst_41 {dimension_numbers = #tpu.dot_dimension_numbers<[1], [0], [0], [1], [0, 0, 1, 1], [], []>} : vector<16x8xf32>, vector<8x8xf32>, vector<16x8xf32> -> vector<16x8xf32>
      %c1_42 = arith.constant 1 : index
      %c0_43 = arith.constant 0 : index
      %31 = vector.load %arg5[%c1_42, %c0_43] : memref<18x8xf32, #tpu.memory_space<vmem>>, vector<16x8xf32>
      %cst_44 = arith.constant dense<0.000000e+00> : vector<16x8xf32>
      %32 = tpu.matmul %31, %10, %cst_44 {dimension_numbers = #tpu.dot_dimension_numbers<[1], [0], [0], [1], [0, 0, 1, 1], [], []>} : vector<16x8xf32>, vector<8x8xf32>, vector<16x8xf32> -> vector<16x8xf32>
      %33 = arith.addf %30, %32 : vector<16x8xf32>
      %c2_45 = arith.constant 2 : index
      %c0_46 = arith.constant 0 : index
      %34 = vector.load %arg5[%c2_45, %c0_46] : memref<18x8xf32, #tpu.memory_space<vmem>>, vector<16x8xf32>
      %cst_47 = arith.constant dense<0.000000e+00> : vector<16x8xf32>
      %35 = tpu.matmul %34, %12, %cst_47 {dimension_numbers = #tpu.dot_dimension_numbers<[1], [0], [0], [1], [0, 0, 1, 1], [], []>} : vector<16x8xf32>, vector<8x8xf32>, vector<16x8xf32> -> vector<16x8xf32>
      %36 = arith.addf %33, %35 : vector<16x8xf32>
      %cst_48 = arith.constant 0.000000e+00 : f32
      %37 = vector.broadcast %cst_48 : f32 to vector<16x8xf32>
      %38 = arith.maximumf %36, %37 : vector<16x8xf32>
      %39 = arith.addf %23, %38 : vector<16x8xf32>
      %c0_49 = arith.constant 0 : index
      %40 = arith.index_cast %arg6 : i32 to index
      %c0_50 = arith.constant 0 : index
      %c0_51 = arith.constant 0 : index
      %41 = vector.load %arg4[%c0_49, %40, %c0_50, %c0_51] : memref<1x16x16x8xf32, #tpu.memory_space<vmem>>, vector<1x1x16x8xf32>
      %42 = vector.shape_cast %41 : vector<1x1x16x8xf32> to vector<16x8xf32>
      %43 = vector.shape_cast %39 : vector<16x8xf32> to vector<1x1x16x8xf32>
      tpu.vector_store %arg4[%c0_49, %40, %c0_50, %c0_51], %43 {strides = array<i32>} : memref<1x16x16x8xf32, #tpu.memory_space<vmem>>, vector<1x1x16x8xf32>,
    }
    %c15_i32_26 = arith.constant 15 : i32
    %c0_i32 = arith.constant 0 : i32
    %c15_i32_27 = arith.constant 15 : i32
    %20 = arith.addi %c0_i32, %c15_i32_27 : i32
    %c1_i32_28 = arith.constant 1 : i32
    scf.for %arg6 = %c0_i32 to %20 step %c1_i32_28  : i32 {
      %c14_i32 = arith.constant 14 : i32
      %21 = arith.subi %c14_i32, %arg6 : i32
      %c0_30 = arith.constant 0 : index
      %22 = arith.index_cast %21 : i32 to index
      %c0_31 = arith.constant 0 : index
      %c0_32 = arith.constant 0 : index
      %23 = vector.load %arg4[%c0_30, %22, %c0_31, %c0_32] : memref<1x16x16x8xf32, #tpu.memory_space<vmem>>, vector<1x1x16x8xf32>
      %24 = vector.shape_cast %23 : vector<1x1x16x8xf32> to vector<16x8xf32>
      %c1_i32_33 = arith.constant 1 : i32
      %25 = arith.addi %21, %c1_i32_33 : i32
      %c0_34 = arith.constant 0 : index
      %26 = arith.index_cast %25 : i32 to index
      %c0_35 = arith.constant 0 : index
      %c0_36 = arith.constant 0 : index
      %27 = vector.load %arg4[%c0_34, %26, %c0_35, %c0_36] : memref<1x16x16x8xf32, #tpu.memory_space<vmem>>, vector<1x1x16x8xf32>
      %28 = vector.shape_cast %27 : vector<1x1x16x8xf32> to vector<16x8xf32>
      %c1_37 = arith.constant 1 : index
      %c0_38 = arith.constant 0 : index
      %29 = vector.load %arg5[%c1_37, %c0_38] : memref<18x8xf32, #tpu.memory_space<vmem>>, vector<16x8xf32>
      tpu.vector_store %arg5[%c1_37, %c0_38], %28 {strides = array<i32>} : memref<18x8xf32, #tpu.memory_space<vmem>>, vector<16x8xf32>,
      %c0_39 = arith.constant 0 : index
      %c0_40 = arith.constant 0 : index
      %30 = vector.load %arg5[%c0_39, %c0_40] : memref<18x8xf32, #tpu.memory_space<vmem>>, vector<16x8xf32>
      %cst_41 = arith.constant dense<0.000000e+00> : vector<16x8xf32>
      %31 = tpu.matmul %30, %14, %cst_41 {dimension_numbers = #tpu.dot_dimension_numbers<[1], [0], [0], [1], [0, 0, 1, 1], [], []>} : vector<16x8xf32>, vector<8x8xf32>, vector<16x8xf32> -> vector<16x8xf32>
      %c1_42 = arith.constant 1 : index
      %c0_43 = arith.constant 0 : index
      %32 = vector.load %arg5[%c1_42, %c0_43] : memref<18x8xf32, #tpu.memory_space<vmem>>, vector<16x8xf32>
      %cst_44 = arith.constant dense<0.000000e+00> : vector<16x8xf32>
      %33 = tpu.matmul %32, %16, %cst_44 {dimension_numbers = #tpu.dot_dimension_numbers<[1], [0], [0], [1], [0, 0, 1, 1], [], []>} : vector<16x8xf32>, vector<8x8xf32>, vector<16x8xf32> -> vector<16x8xf32>
      %34 = arith.addf %31, %33 : vector<16x8xf32>
      %c2_45 = arith.constant 2 : index
      %c0_46 = arith.constant 0 : index
      %35 = vector.load %arg5[%c2_45, %c0_46] : memref<18x8xf32, #tpu.memory_space<vmem>>, vector<16x8xf32>
      %cst_47 = arith.constant dense<0.000000e+00> : vector<16x8xf32>
      %36 = tpu.matmul %35, %18, %cst_47 {dimension_numbers = #tpu.dot_dimension_numbers<[1], [0], [0], [1], [0, 0, 1, 1], [], []>} : vector<16x8xf32>, vector<8x8xf32>, vector<16x8xf32> -> vector<16x8xf32>
      %37 = arith.addf %34, %36 : vector<16x8xf32>
      %cst_48 = arith.constant 0.000000e+00 : f32
      %38 = vector.broadcast %cst_48 : f32 to vector<16x8xf32>
      %39 = arith.maximumf %37, %38 : vector<16x8xf32>
      %40 = arith.addf %24, %39 : vector<16x8xf32>
      %c0_49 = arith.constant 0 : index
      %41 = arith.index_cast %21 : i32 to index
      %c0_50 = arith.constant 0 : index
      %c0_51 = arith.constant 0 : index
      %42 = vector.load %arg4[%c0_49, %41, %c0_50, %c0_51] : memref<1x16x16x8xf32, #tpu.memory_space<vmem>>, vector<1x1x16x8xf32>
      %43 = vector.shape_cast %42 : vector<1x1x16x8xf32> to vector<16x8xf32>
      %44 = vector.shape_cast %40 : vector<16x8xf32> to vector<1x1x16x8xf32>
      tpu.vector_store %arg4[%c0_49, %41, %c0_50, %c0_51], %44 {strides = array<i32>} : memref<1x16x16x8xf32, #tpu.memory_space<vmem>>, vector<1x1x16x8xf32>,
    }
    %c15_i32_29 = arith.constant 15 : i32
    return
  }
  func.func @transform_0(%arg0: i32) -> (i32, i32, i32, i32) {
    %c0_i32 = arith.constant 0 : i32
    %c0_i32_0 = arith.constant 0 : i32
    %c0_i32_1 = arith.constant 0 : i32
    %c0_i32_2 = arith.constant 0 : i32
    return %arg0, %c0_i32, %c0_i32_0, %c0_i32_1 : i32, i32, i32, i32
  }
  func.func @transform_1(%arg0: i32) -> (i32, i32, i32) {
    %c0_i32 = arith.constant 0 : i32
    %c0_i32_0 = arith.constant 0 : i32
    %c0_i32_1 = arith.constant 0 : i32
    %c0_i32_2 = arith.constant 0 : i32
    return %c0_i32, %c0_i32_0, %c0_i32_1 : i32, i32, i32
  }
  func.func @transform_2(%arg0: i32) -> (i32, i32, i32) {
    %c0_i32 = arith.constant 0 : i32
    %c0_i32_0 = arith.constant 0 : i32
    %c0_i32_1 = arith.constant 0 : i32
    %c0_i32_2 = arith.constant 0 : i32
    return %c0_i32, %c0_i32_0, %c0_i32_1 : i32, i32, i32
  }
  func.func @transform_3(%arg0: i32) -> (i32, i32, i32, i32) {
    %c0_i32 = arith.constant 0 : i32
    %c0_i32_0 = arith.constant 0 : i32
    %c0_i32_1 = arith.constant 0 : i32
    %c0_i32_2 = arith.constant 0 : i32
    return %arg0, %c0_i32, %c0_i32_0, %c0_i32_1 : i32, i32, i32, i32
  }
}

</mosaic_0001>

<llo_original>
// kernel: scnn_forward.2
$region0: #{scnn_forward.2}
  #allocation0 [shape = 'u32[]', space=smem, size = 0x4, offset = 0x4, fixed_abs, tag = 'smem constant byte address 0x4 - core index']
  #allocation1 [shape = 'u32[144,128]{1,0:T(1,128)}', space=vmem, size = 0x12000, scoped, tag = 'internal scratch']
  #allocation2 [shape = 'f32[18,8]{1,0:T(8,128)}', space=vmem, size = 0x3000, scoped, tag = 'scratch operand']
  %s0 = inlined_call_operand.vmem [shape: f32[2,16,16,8], index: 0, kind: input, shape index: {}, may-alias: {0,3}]
  %s1 = inlined_call_operand.vmem [shape: f32[3,8,8], index: 1, kind: input, shape index: {}]
  %s2 = inlined_call_operand.vmem [shape: f32[3,8,8], index: 2, kind: input, shape index: {}]
  %s3 = inlined_call_operand.vmem [shape: f32[2,16,16,8], index: 3, kind: output, shape index: {}, may-alias: {0,3}]
  %s4 = sld [smem:[#allocation0]]
  $region59: #{scnn_forward.2} parent=0
    _
  %s6 = ssub.s32 1, %s4
  %s7 = scalar_select 0, %s6, %s4
  loop: start=0, step=1, limit=4
  $region2: #{scnn_forward.2} parent=0 // loop_pre_header
    _
  $region3: #{scnn_forward.2} parent=0 // loop_header
    %s9 = sphi 0, %s13
    %p10 = scmp.ge.s32.totalorder %s9, 4
    %s19 = sphi 0, %s21
    %s22 = sphi 0, %s19
    %s23 = sphi 0, %s22
    %s39 = sphi 0, %s23
    %s43 = sphi 0, %s43
    %s45 = sphi 0, %s43
    %s46 = sphi 0, %s45
    %s60 = sphi 0, %s46
    %s64 = sphi 0, %s64
    %s66 = sphi 0, %s64
    %s67 = sphi 0, %s66
    %s81 = sphi 0, %s67
    %s87 = sphi 0, %s89
    %s90 = sphi 0, %s87
    %s91 = sphi 0, %s90
    %s107 = sphi 0, %s91
  $region4: #{scnn_forward.2} parent=0 // loop_header_branch
    %12 = sbr.rel (%p10) target = $region8
  $region5: #{scnn_forward.2} parent=0 // loop_body
    %s14 = ssub.s32 %s9, 1
    %s15 = ssub.s32 %s9, 2
    %s16 = sadd.s32 %s9, 1
    %s17 = ssub.s32 %s9, %s16
    %p18 = scmp.eq.s32.totalorder %s17, 0
    %s20 = sadd.s32 %s19, 1
    %s21 = scalar_select %p18, %s19, %s20
    %p24 = pneg %p18
    %p25 = scmp.eq.s32.totalorder %s9, 1
    %p26 = por %p24, %p25
    %p27 = scmp.ne.s32.totalorder %s19, %s22
    %p28 = scmp.eq.s32.totalorder %s9, 0
    %p29 = por %p27, %p28
    %p30 = scmp.ne.s32.totalorder %s19, %s22
    %p31 = scmp.eq.s32.totalorder %s14, 1
    %p32 = por %p30, %p31
    %p33 = scmp.ne.s32.totalorder %s22, %s23
    %p34 = scmp.eq.s32.totalorder %s14, 0
    %p35 = por %p33, %p34
    %p36 = scmp.ne.s32.totalorder %s22, %s23
    %p37 = scmp.eq.s32.totalorder %s15, 1
    %p38 = por %p36, %p37
    %p40 = scmp.ne.s32.totalorder %s23, %s39
    %p41 = scmp.eq.s32.totalorder %s15, 0
    %p42 = por %p40, %p41
    %s44 = sadd.s32 %s43, 1
    %p47 = scmp.eq.s32.totalorder %s9, 1
    %p48 = scmp.ne.s32.totalorder %s43, %s45
    %p49 = scmp.eq.s32.totalorder %s9, 0
    %p50 = por %p48, %p49
    %p51 = scmp.ne.s32.totalorder %s43, %s45
    %p52 = scmp.eq.s32.totalorder %s14, 1
    %p53 = por %p51, %p52
    %p54 = scmp.ne.s32.totalorder %s45, %s46
    %p55 = scmp.eq.s32.totalorder %s14, 0
    %p56 = por %p54, %p55
    %p57 = scmp.ne.s32.totalorder %s45, %s46
    %p58 = scmp.eq.s32.totalorder %s15, 1
    %p59 = por %p57, %p58
    %p61 = scmp.ne.s32.totalorder %s46, %s60
    %p62 = scmp.eq.s32.totalorder %s15, 0
    %p63 = por %p61, %p62
    %s65 = sadd.s32 %s64, 1
    %p68 = scmp.eq.s32.totalorder %s9, 1
    %p69 = scmp.ne.s32.totalorder %s64, %s66
    %p70 = scmp.eq.s32.totalorder %s9, 0
    %p71 = por %p69, %p70
    %p72 = scmp.ne.s32.totalorder %s64, %s66
    %p73 = scmp.eq.s32.totalorder %s14, 1
    %p74 = por %p72, %p73
    %p75 = scmp.ne.s32.totalorder %s66, %s67
    %p76 = scmp.eq.s32.totalorder %s14, 0
    %p77 = por %p75, %p76
    %p78 = scmp.ne.s32.totalorder %s66, %s67
    %p79 = scmp.eq.s32.totalorder %s15, 1
    %p80 = por %p78, %p79
    %p82 = scmp.ne.s32.totalorder %s67, %s81
    %p83 = scmp.eq.s32.totalorder %s15, 0
    %p84 = por %p82, %p83
    %s85 = ssub.s32 %s9, %s16
    %p86 = scmp.eq.s32.totalorder %s85, 0
    %s88 = sadd.s32 %s87, 1
    %s89 = scalar_select %p86, %s87, %s88
    %p92 = pneg %p86
    %p93 = scmp.eq.s32.totalorder %s9, 1
    %p94 = por %p92, %p93
    %p95 = scmp.ne.s32.totalorder %s87, %s90
    %p96 = scmp.eq.s32.totalorder %s9, 0
    %p97 = por %p95, %p96
    %p98 = scmp.ne.s32.totalorder %s87, %s90
    %p99 = scmp.eq.s32.totalorder %s14, 1
    %p100 = por %p98, %p99
    %p101 = scmp.ne.s32.totalorder %s90, %s91
    %p102 = scmp.eq.s32.totalorder %s14, 0
    %p103 = por %p101, %p102
    %p104 = scmp.ne.s32.totalorder %s90, %s91
    %p105 = scmp.eq.s32.totalorder %s15, 1
    %p106 = por %p104, %p105
    %p108 = scmp.ne.s32.totalorder %s91, %s107
    %p109 = scmp.eq.s32.totalorder %s15, 0
    %p110 = por %p108, %p109
    %p111 = scmp.le.s32.totalorder 1, %s9
    %p112 = scmp.lt.s32.totalorder %s9, 3
    %p113 = pnand %p111, %p112
    %p114 = pneg %p113
    // Predicated region
    $region9: #{scnn_forward.2} parent=5 // pred_check
      _
    $region10: #{scnn_forward.2} parent=5 // pred_check_branch
      %116 = sbr.rel (%p113) target = $region12
    $region11: #{scnn_forward.2} parent=5 // pred_region
      %s117 = ssub.s32 %s9, 1
      // Predicated region
      $region13: #{scnn_forward.2} parent=11 // pred_check
        %p118 = pneg %p56
      $region14: #{scnn_forward.2} parent=11 // pred_check_branch
        %120 = sbr.rel (%p118) target = $region16
      $region15: #{scnn_forward.2} parent=11 // pred_region
        _
      $region16: #{scnn_forward.2} parent=11 // pred_fallthru
        _
      // Predicated region
      $region17: #{scnn_forward.2} parent=11 // pred_check
        %p121 = pneg %p77
      $region18: #{scnn_forward.2} parent=11 // pred_check_branch
        %123 = sbr.rel (%p121) target = $region20
      $region19: #{scnn_forward.2} parent=11 // pred_region
        _
      $region20: #{scnn_forward.2} parent=11 // pred_fallthru
        _
    $region12: #{scnn_forward.2} parent=5 // pred_fallthru
      _
    %p124 = scmp.lt.s32.totalorder %s9, 2
    // Predicated region
    $region21: #{scnn_forward.2} parent=5 // pred_check
      %p125 = pneg %p124
    $region22: #{scnn_forward.2} parent=5 // pred_check_branch
      %127 = sbr.rel (%p125) target = $region24
    $region23: #{scnn_forward.2} parent=5 // pred_region
      // Predicated region
      $region25: #{scnn_forward.2} parent=23 // pred_check
        %p128 = pneg %p29
      $region26: #{scnn_forward.2} parent=23 // pred_check_branch
        %130 = sbr.rel (%p128) target = $region28
      $region27: #{scnn_forward.2} parent=23 // pred_region
        %p131 = scmp.lt.s32.totalorder %s9, 1
        %s132 = scalar_select %p131, %s9, 1
        %s133 = smul.addr %s132, 32
        %s134 = smul.addr %s133, 8
        %s135 = scalar_lea.vmem %s0, %s134
      $region28: #{scnn_forward.2} parent=23 // pred_fallthru
        _
    $region24: #{scnn_forward.2} parent=5 // pred_fallthru
      _
    %p136 = scmp.le.s32.totalorder 1, %s9
    %p137 = scmp.lt.s32.totalorder %s9, 3
    %p138 = pnand %p136, %p137
    %p139 = pneg %p138
    // Predicated region
    $region29: #{scnn_forward.2} parent=5 // pred_check
      _
    $region30: #{scnn_forward.2} parent=5 // pred_check_branch
      %141 = sbr.rel (%p138) target = $region32
    $region31: #{scnn_forward.2} parent=5 // pred_region
      %s142 = ssub.s32 %s9, 1
      %p143 = scmp.lt.s32.totalorder %s14, 1
      %s144 = scalar_select %p143, %s14, 1
      %s145 = smul.addr %s144, 32
      %s146 = smul.addr %s145, 8
      %s147 = scalar_lea.vmem %s0, %s146
      %p148 = pneg %p35
      %p149 = pneg %p32
      %p150 = pneg %p56
      %p151 = pneg %p53
      %p152 = pneg %p77
      %p153 = pneg %p74
      %p154 = pneg %p103
      %p155 = pneg %p100
      %p156 = scmp.lt.s32.totalorder %s14, 1
      %s157 = scalar_select %p156, %s14, 1
      %s158 = smul.addr %s157, 32
      %s159 = smul.addr %s158, 8
      %s160 = scalar_lea.vmem %s3, %s159
      %p161 = scmp.lt.s32.totalorder %s14, 1
      %s162 = scalar_select %p161, %s14, 1
      %s163 = smul.addr %s162, 32
      %s164 = smul.addr %s163, 8
      %s165 = scalar_lea.vmem %s0, %s164
      %p166 = scmp.lt.s32.totalorder %s14, 1
      %s167 = scalar_select %p166, %s14, 1
      %s168 = smul.addr %s167, 32
      %s169 = smul.addr %s168, 8
      %s170 = scalar_lea.vmem %s3, %s169
      %v171 = vld [vmem:[%s165] sm:$0xff]
      %v172 = vld [vmem:[%s165 + $0x8] sm:$0xff]
      %v173 = vld [vmem:[%s165 + $0x10] sm:$0xff]
      %v174 = vld [vmem:[%s165 + $0x18] sm:$0xff]
      %v175 = vld [vmem:[%s165 + $0x20] sm:$0xff]
      %v176 = vld [vmem:[%s165 + $0x28] sm:$0xff]
      %v177 = vld [vmem:[%s165 + $0x30] sm:$0xff]
      %v178 = vld [vmem:[%s165 + $0x38] sm:$0xff]
      %v179 = vld [vmem:[%s165 + $0x40] sm:$0xff]
      %v180 = vld [vmem:[%s165 + $0x48] sm:$0xff]
      %v181 = vld [vmem:[%s165 + $0x50] sm:$0xff]
      %v182 = vld [vmem:[%s165 + $0x58] sm:$0xff]
      %v183 = vld [vmem:[%s165 + $0x60] sm:$0xff]
      %v184 = vld [vmem:[%s165 + $0x68] sm:$0xff]
      %v185 = vld [vmem:[%s165 + $0x70] sm:$0xff]
      %v186 = vld [vmem:[%s165 + $0x78] sm:$0xff]
      %v187 = vld [vmem:[%s165 + $0x80] sm:$0xff]
      %v188 = vld [vmem:[%s165 + $0x88] sm:$0xff]
      %v189 = vld [vmem:[%s165 + $0x90] sm:$0xff]
      %v190 = vld [vmem:[%s165 + $0x98] sm:$0xff]
      %v191 = vld [vmem:[%s165 + $0xa0] sm:$0xff]
      %v192 = vld [vmem:[%s165 + $0xa8] sm:$0xff]
      %v193 = vld [vmem:[%s165 + $0xb0] sm:$0xff]
      %v194 = vld [vmem:[%s165 + $0xb8] sm:$0xff]
      %v195 = vld [vmem:[%s165 + $0xc0] sm:$0xff]
      %v196 = vld [vmem:[%s165 + $0xc8] sm:$0xff]
      %v197 = vld [vmem:[%s165 + $0xd0] sm:$0xff]
      %v198 = vld [vmem:[%s165 + $0xd8] sm:$0xff]
      %v199 = vld [vmem:[%s165 + $0xe0] sm:$0xff]
      %v200 = vld [vmem:[%s165 + $0xe8] sm:$0xff]
      %v201 = vld [vmem:[%s165 + $0xf0] sm:$0xff]
      %v202 = vld [vmem:[%s165 + $0xf8] sm:$0xff]
      %vm203 = vcmask 64512
      %204 = vst.msk [vmem:[%s170] sm:$0xff] %vm203, %v171
      %205 = vst.msk [vmem:[%s170 + $0x8] sm:$0xff] %vm203, %v172
      %206 = vst.msk [vmem:[%s170 + $0x10] sm:$0xff] %vm203, %v173
      %207 = vst.msk [vmem:[%s170 + $0x18] sm:$0xff] %vm203, %v174
      %208 = vst.msk [vmem:[%s170 + $0x20] sm:$0xff] %vm203, %v175
      %209 = vst.msk [vmem:[%s170 + $0x28] sm:$0xff] %vm203, %v176
      %210 = vst.msk [vmem:[%s170 + $0x30] sm:$0xff] %vm203, %v177
      %211 = vst.msk [vmem:[%s170 + $0x38] sm:$0xff] %vm203, %v178
      %212 = vst.msk [vmem:[%s170 + $0x40] sm:$0xff] %vm203, %v179
      %213 = vst.msk [vmem:[%s170 + $0x48] sm:$0xff] %vm203, %v180
      %214 = vst.msk [vmem:[%s170 + $0x50] sm:$0xff] %vm203, %v181
      %215 = vst.msk [vmem:[%s170 + $0x58] sm:$0xff] %vm203, %v182
      %216 = vst.msk [vmem:[%s170 + $0x60] sm:$0xff] %vm203, %v183
      %217 = vst.msk [vmem:[%s170 + $0x68] sm:$0xff] %vm203, %v184
      %218 = vst.msk [vmem:[%s170 + $0x70] sm:$0xff] %vm203, %v185
      %219 = vst.msk [vmem:[%s170 + $0x78] sm:$0xff] %vm203, %v186
      %220 = vst.msk [vmem:[%s170 + $0x80] sm:$0xff] %vm203, %v187
      %221 = vst.msk [vmem:[%s170 + $0x88] sm:$0xff] %vm203, %v188
      %222 = vst.msk [vmem:[%s170 + $0x90] sm:$0xff] %vm203, %v189
      %223 = vst.msk [vmem:[%s170 + $0x98] sm:$0xff] %vm203, %v190
      %224 = vst.msk [vmem:[%s170 + $0xa0] sm:$0xff] %vm203, %v191
      %225 = vst.msk [vmem:[%s170 + $0xa8] sm:$0xff] %vm203, %v192
      %226 = vst.msk [vmem:[%s170 + $0xb0] sm:$0xff] %vm203, %v193
      %227 = vst.msk [vmem:[%s170 + $0xb8] sm:$0xff] %vm203, %v194
      %228 = vst.msk [vmem:[%s170 + $0xc0] sm:$0xff] %vm203, %v195
      %229 = vst.msk [vmem:[%s170 + $0xc8] sm:$0xff] %vm203, %v196
      %230 = vst.msk [vmem:[%s170 + $0xd0] sm:$0xff] %vm203, %v197
      %231 = vst.msk [vmem:[%s170 + $0xd8] sm:$0xff] %vm203, %v198
      %232 = vst.msk [vmem:[%s170 + $0xe0] sm:$0xff] %vm203, %v199
      %233 = vst.msk [vmem:[%s170 + $0xe8] sm:$0xff] %vm203, %v200
      %234 = vst.msk [vmem:[%s170 + $0xf0] sm:$0xff] %vm203, %v201
      %235 = vst.msk [vmem:[%s170 + $0xf8] sm:$0xff] %vm203, %v202
      %236 = vst.msk [vmem:[#allocation2] sm:$0xff] %vm203, 0.0
      %237 = vst.msk [vmem:[#allocation2 + $0x8] sm:$0xff] %vm203, 0.0
      %vm238 = vcmask 58368
      %239 = vst.msk [vmem:[#allocation2 + $0x10] sm:$0x3] %vm238, 0.0
      %v240 = vld [vmem:[%s1] sm:$0xff]
      %s241 = scalar_lea.vmem %s1, 8
      %v242 = vld [vmem:[%s241] sm:$0xff]
      %s243 = scalar_lea.vmem %s1, 16
      %v244 = vld [vmem:[%s243] sm:$0xff]
      %v245 = vld [vmem:[%s2] sm:$0xff]
      %s246 = scalar_lea.vmem %s2, 8
      %v247 = vld [vmem:[%s246] sm:$0xff]
      %s248 = scalar_lea.vmem %s2, 16
      %v249 = vld [vmem:[%s248] sm:$0xff]
      loop: start=1, step=1, limit=16
      $region33: #{scnn_forward.2} parent=31 // loop_pre_header
        _
      $region34: #{scnn_forward.2} parent=31 // loop_header
        %s251 = sphi 1, %s255
        %p252 = scmp.ge.s32.totalorder %s251, 16
      $region35: #{scnn_forward.2} parent=31 // loop_header_branch
        %254 = sbr.rel (%p252) target = $region39
      $region36: #{scnn_forward.2} parent=31 // loop_body
        %s256 = smul.u32 %s251, 16
        %s257 = scalar_lea.vmem %s170, %s256
        %v258 = vld [vmem:[%s257] sm:$0xff]
        %v259 = vld [vmem:[%s257 + $0x8] sm:$0xff]
        %s260 = ssub.s32 %s251, 1
        %s261 = smul.u32 %s260, 16
        %s262 = scalar_lea.vmem %s170, %s261
        %v263 = vld [vmem:[%s262] sm:$0xff]
        %v264 = vld [vmem:[%s262 + $0x8] sm:$0xff]
        %265 = vst.msk [vmem:[#allocation2 + $0x1] sm:$0xff] %vm203, %v263
        %266 = vst.msk [vmem:[#allocation2 + $0x9] sm:$0xff] %vm203, %v264
        %v267 = vld [vmem:[#allocation2] sm:$0xff]
        %v268 = vld [vmem:[#allocation2 + $0x8] sm:$0xff]
        %v269 = vld [vmem:[#allocation2 + $0x1] sm:$0xff]
        %v270 = vld [vmem:[#allocation2 + $0x9] sm:$0xff]
        %v272 = vsel %vm203, %v269, 0
        %v275 = vsel %vm203, %v270, 0
        %277 = vmatprep.subr.mxu0 0.0
        %278 = vmatpush1.msra.mxu0 %v242
        %279 = vmatprep.subr.mxu0 0.0
        %280 = vmatpush1.msra.mxu0 0.0
        %281 = vmatprep.subr.mxu0 0.0
        %282 = vmatpush1.msra.mxu0 0.0
        %283 = vmatprep.subr.mxu0 0.0
        %284 = vmatpush1.msra.mxu0 0.0
        %285 = vmatprep.subr.mxu0 0.0
        %286 = vmatpush1.msra.mxu0 0.0
        %287 = vmatprep.subr.mxu0 0.0
        %288 = vmatpush1.msra.mxu0 0.0
        %289 = vmatprep.subr.mxu0 0.0
        %290 = vmatpush1.msra.mxu0 0.0
        %291 = vmatprep.subr.mxu0 0.0
        %292 = vmatpush1.msra.mxu0 0.0
        %293 = vmatprep.subr.mxu0 0.0
        %294 = vmatpush1.msra.mxu0 0.0
        %295 = vmatprep.subr.mxu0 0.0
        %296 = vmatpush1.msra.mxu0 0.0
        %297 = vmatprep.subr.mxu0 0.0
        %298 = vmatpush1.msra.mxu0 0.0
        %299 = vmatprep.subr.mxu0 0.0
        %300 = vmatpush1.msra.mxu0 0.0
        %301 = vmatprep.subr.mxu0 0.0
        %302 = vmatpush1.msra.mxu0 0.0
        %303 = vmatprep.subr.mxu0 0.0
        %304 = vmatpush1.msra.mxu0 0.0
        %305 = vmatprep.subr.mxu0 0.0
        %306 = vmatpush1.msra.mxu0 0.0
        %307 = vmatprep.subr.mxu0 0.0
        %308 = vmatpush1.msra.mxu0 0.0
        %309 = vmatprep.subr.mxu0 0.0
        %310 = vmatpush1.msra.mxu0 0.0
        %311 = vmatprep.subr.mxu0 0.0
        %312 = vmatpush1.msra.mxu0 0.0
        %313 = vmatprep.subr.mxu0 0.0
        %314 = vmatpush1.msra.mxu0 0.0
        %315 = vmatprep.subr.mxu0 0.0
        %316 = vmatpush1.msra.mxu0 0.0
        %317 = vmatprep.subr.mxu0 0.0
        %318 = vmatpush1.msra.mxu0 0.0
        %319 = vmatprep.subr.mxu0 0.0
        %320 = vmatpush1.msra.mxu0 0.0
        %321 = vmatprep.subr.mxu0 0.0
        %322 = vmatpush1.msra.mxu0 0.0
        %323 = vmatprep.subr.mxu0 0.0
        %324 = vmatpush1.msra.mxu0 0.0
        %325 = vmatprep.subr.mxu0 0.0
        %326 = vmatpush1.msra.mxu0 0.0
        %327 = vmatprep.subr.mxu0 0.0
        %328 = vmatpush1.msra.mxu0 0.0
        %329 = vmatprep.subr.mxu0 0.0
        %330 = vmatpush1.msra.mxu0 0.0
        %331 = vmatprep.subr.mxu0 0.0
        %332 = vmatpush1.msra.mxu0 0.0
        %333 = vmatprep.subr.mxu0 0.0
        %334 = vmatpush1.msra.mxu0 0.0
        %335 = vmatprep.subr.mxu0 0.0
        %336 = vmatpush1.msra.mxu0 0.0
        %337 = vmatprep.subr.mxu0 0.0
        %338 = vmatpush1.msra.mxu0 0.0
        %339 = vmatprep.subr.mxu0 0.0
        %340 = vmatpush1.msra.mxu0 0.0
        %341 = vmatprep.mubr.f32.mxu0 0.0
        %342 = vmatmul.mubr.f32.gmra.mrb[0].mxu0 %v272
        %v343 = vpop.f32.mrb[0].mxu0
        %v344 = vadd.f32 0.0, %v343
        %v345 = vpop.f32.mrb[0].mxu0
        %346 = vmatprep.mubr.f32.mxu0 0.0
        %347 = vmatmul.mubr.f32.gmra.mrb[0].mxu0 %v275
        %v348 = vpop.f32.mrb[0].mxu0
        %v349 = vadd.f32 0.0, %v348
        %v350 = vpop.f32.mrb[0].mxu0
        %351 = vdwg.mxu0
        %v353 = vsel %vm203, %v267, 0
        %v356 = vsel %vm203, %v268, 0
        %358 = vmatprep.subr.mxu0 0.0
        %359 = vmatpush1.msra.mxu0 %v240
        %360 = vmatprep.subr.mxu0 0.0
        %361 = vmatpush1.msra.mxu0 0.0
        %362 = vmatprep.subr.mxu0 0.0
        %363 = vmatpush1.msra.mxu0 0.0
        %364 = vmatprep.subr.mxu0 0.0
        %365 = vmatpush1.msra.mxu0 0.0
        %366 = vmatprep.subr.mxu0 0.0
        %367 = vmatpush1.msra.mxu0 0.0
        %368 = vmatprep.subr.mxu0 0.0
        %369 = vmatpush1.msra.mxu0 0.0
        %370 = vmatprep.subr.mxu0 0.0
        %371 = vmatpush1.msra.mxu0 0.0
        %372 = vmatprep.subr.mxu0 0.0
        %373 = vmatpush1.msra.mxu0 0.0
        %374 = vmatprep.subr.mxu0 0.0
        %375 = vmatpush1.msra.mxu0 0.0
        %376 = vmatprep.subr.mxu0 0.0
        %377 = vmatpush1.msra.mxu0 0.0
        %378 = vmatprep.subr.mxu0 0.0
        %379 = vmatpush1.msra.mxu0 0.0
        %380 = vmatprep.subr.mxu0 0.0
        %381 = vmatpush1.msra.mxu0 0.0
        %382 = vmatprep.subr.mxu0 0.0
        %383 = vmatpush1.msra.mxu0 0.0
        %384 = vmatprep.subr.mxu0 0.0
        %385 = vmatpush1.msra.mxu0 0.0
        %386 = vmatprep.subr.mxu0 0.0
        %387 = vmatpush1.msra.mxu0 0.0
        %388 = vmatprep.subr.mxu0 0.0
        %389 = vmatpush1.msra.mxu0 0.0
        %390 = vmatprep.subr.mxu0 0.0
        %391 = vmatpush1.msra.mxu0 0.0
        %392 = vmatprep.subr.mxu0 0.0
        %393 = vmatpush1.msra.mxu0 0.0
        %394 = vmatprep.subr.mxu0 0.0
        %395 = vmatpush1.msra.mxu0 0.0
        %396 = vmatprep.subr.mxu0 0.0
        %397 = vmatpush1.msra.mxu0 0.0
        %398 = vmatprep.subr.mxu0 0.0
        %399 = vmatpush1.msra.mxu0 0.0
        %400 = vmatprep.subr.mxu0 0.0
        %401 = vmatpush1.msra.mxu0 0.0
        %402 = vmatprep.subr.mxu0 0.0
        %403 = vmatpush1.msra.mxu0 0.0
        %404 = vmatprep.subr.mxu0 0.0
        %405 = vmatpush1.msra.mxu0 0.0
        %406 = vmatprep.subr.mxu0 0.0
        %407 = vmatpush1.msra.mxu0 0.0
        %408 = vmatprep.subr.mxu0 0.0
        %409 = vmatpush1.msra.mxu0 0.0
        %410 = vmatprep.subr.mxu0 0.0
        %411 = vmatpush1.msra.mxu0 0.0
        %412 = vmatprep.subr.mxu0 0.0
        %413 = vmatpush1.msra.mxu0 0.0
        %414 = vmatprep.subr.mxu0 0.0
        %415 = vmatpush1.msra.mxu0 0.0
        %416 = vmatprep.subr.mxu0 0.0
        %417 = vmatpush1.msra.mxu0 0.0
        %418 = vmatprep.subr.mxu0 0.0
        %419 = vmatpush1.msra.mxu0 0.0
        %420 = vmatprep.subr.mxu0 0.0
        %421 = vmatpush1.msra.mxu0 0.0
        %422 = vmatprep.mubr.f32.mxu0 0.0
        %423 = vmatmul.mubr.f32.gmra.mrb[0].mxu0 %v353
        %v424 = vpop.f32.mrb[0].mxu0
        %v425 = vadd.f32 %v344, %v424
        %v426 = vpop.f32.mrb[0].mxu0
        %427 = vmatprep.mubr.f32.mxu0 0.0
        %428 = vmatmul.mubr.f32.gmra.mrb[0].mxu0 %v356
        %v429 = vpop.f32.mrb[0].mxu0
        %v430 = vadd.f32 %v349, %v429
        %v431 = vpop.f32.mrb[0].mxu0
        %432 = vdwg.mxu0
        %v433 = vld [vmem:[#allocation2 + $0x2] sm:$0xff]
        %v434 = vld [vmem:[#allocation2 + $0xa] sm:$0xff]
        %v436 = vsel %vm203, %v433, 0
        %v439 = vsel %vm203, %v434, 0
        %441 = vmatprep.subr.mxu0 0.0
        %442 = vmatpush1.msra.mxu0 %v244
        %443 = vmatprep.subr.mxu0 0.0
        %444 = vmatpush1.msra.mxu0 0.0
        %445 = vmatprep.subr.mxu0 0.0
        %446 = vmatpush1.msra.mxu0 0.0
        %447 = vmatprep.subr.mxu0 0.0
        %448 = vmatpush1.msra.mxu0 0.0
        %449 = vmatprep.subr.mxu0 0.0
        %450 = vmatpush1.msra.mxu0 0.0
        %451 = vmatprep.subr.mxu0 0.0
        %452 = vmatpush1.msra.mxu0 0.0
        %453 = vmatprep.subr.mxu0 0.0
        %454 = vmatpush1.msra.mxu0 0.0
        %455 = vmatprep.subr.mxu0 0.0
        %456 = vmatpush1.msra.mxu0 0.0
        %457 = vmatprep.subr.mxu0 0.0
        %458 = vmatpush1.msra.mxu0 0.0
        %459 = vmatprep.subr.mxu0 0.0
        %460 = vmatpush1.msra.mxu0 0.0
        %461 = vmatprep.subr.mxu0 0.0
        %462 = vmatpush1.msra.mxu0 0.0
        %463 = vmatprep.subr.mxu0 0.0
        %464 = vmatpush1.msra.mxu0 0.0
        %465 = vmatprep.subr.mxu0 0.0
        %466 = vmatpush1.msra.mxu0 0.0
        %467 = vmatprep.subr.mxu0 0.0
        %468 = vmatpush1.msra.mxu0 0.0
        %469 = vmatprep.subr.mxu0 0.0
        %470 = vmatpush1.msra.mxu0 0.0
        %471 = vmatprep.subr.mxu0 0.0
        %472 = vmatpush1.msra.mxu0 0.0
        %473 = vmatprep.subr.mxu0 0.0
        %474 = vmatpush1.msra.mxu0 0.0
        %475 = vmatprep.subr.mxu0 0.0
        %476 = vmatpush1.msra.mxu0 0.0
        %477 = vmatprep.subr.mxu0 0.0
        %478 = vmatpush1.msra.mxu0 0.0
        %479 = vmatprep.subr.mxu0 0.0
        %480 = vmatpush1.msra.mxu0 0.0
        %481 = vmatprep.subr.mxu0 0.0
        %482 = vmatpush1.msra.mxu0 0.0
        %483 = vmatprep.subr.mxu0 0.0
        %484 = vmatpush1.msra.mxu0 0.0
        %485 = vmatprep.subr.mxu0 0.0
        %486 = vmatpush1.msra.mxu0 0.0
        %487 = vmatprep.subr.mxu0 0.0
        %488 = vmatpush1.msra.mxu0 0.0
        %489 = vmatprep.subr.mxu0 0.0
        %490 = vmatpush1.msra.mxu0 0.0
        %491 = vmatprep.subr.mxu0 0.0
        %492 = vmatpush1.msra.mxu0 0.0
        %493 = vmatprep.subr.mxu0 0.0
        %494 = vmatpush1.msra.mxu0 0.0
        %495 = vmatprep.subr.mxu0 0.0
        %496 = vmatpush1.msra.mxu0 0.0
        %497 = vmatprep.subr.mxu0 0.0
        %498 = vmatpush1.msra.mxu0 0.0
        %499 = vmatprep.subr.mxu0 0.0
        %500 = vmatpush1.msra.mxu0 0.0
        %501 = vmatprep.subr.mxu0 0.0
        %502 = vmatpush1.msra.mxu0 0.0
        %503 = vmatprep.subr.mxu0 0.0
        %504 = vmatpush1.msra.mxu0 0.0
        %505 = vmatprep.mubr.f32.mxu0 0.0
        %506 = vmatmul.mubr.f32.gmra.mrb[0].mxu0 %v436
        %v507 = vpop.f32.mrb[0].mxu0
        %v508 = vadd.f32 0.0, %v507
        %v509 = vpop.f32.mrb[0].mxu0
        %510 = vmatprep.mubr.f32.mxu0 0.0
        %511 = vmatmul.mubr.f32.gmra.mrb[0].mxu0 %v439
        %v512 = vpop.f32.mrb[0].mxu0
        %v513 = vadd.f32 0.0, %v512
        %v514 = vpop.f32.mrb[0].mxu0
        %515 = vdwg.mxu0
        %v516 = vadd.f32 %v425, %v508
        %v517 = vadd.f32 %v430, %v513
        %v518 = vmax.f32 %v516, 0.0
        %v519 = vmax.f32 %v517, 0.0
        %v520 = vadd.f32 %v258, %v518
        %v521 = vadd.f32 %v259, %v519
        %522 = vst.msk [vmem:[%s257] sm:$0xff] %vm203, %v520
        %523 = vst.msk [vmem:[%s257 + $0x8] sm:$0xff] %vm203, %v521
      $region37: #{scnn_forward.2} parent=31 // loop_footer
        %s255 = sadd.s32 1, %s251
      $region38: #{scnn_forward.2} parent=31 // loop_footer_branch
        %250 = sbr.rel target = $region34
      $region39: #{scnn_forward.2} parent=31 // loop_exit
        _
      loop: start=0, step=1, limit=15
      $region40: #{scnn_forward.2} parent=31 // loop_pre_header
        _
      $region41: #{scnn_forward.2} parent=31 // loop_header
        %s525 = sphi 0, %s529
        %p526 = scmp.ge.s32.totalorder %s525, 15
      $region42: #{scnn_forward.2} parent=31 // loop_header_branch
        %528 = sbr.rel (%p526) target = $region46
      $region43: #{scnn_forward.2} parent=31 // loop_body
        %s530 = ssub.s32 14, %s525
        %s531 = smul.u32 %s530, 16
        %s532 = scalar_lea.vmem %s170, %s531
        %v533 = vld [vmem:[%s532] sm:$0xff]
        %v534 = vld [vmem:[%s532 + $0x8] sm:$0xff]
        %s535 = ssub.s32 15, %s525
        %s536 = smul.u32 %s535, 16
        %s537 = scalar_lea.vmem %s170, %s536
        %v538 = vld [vmem:[%s537] sm:$0xff]
        %v539 = vld [vmem:[%s537 + $0x8] sm:$0xff]
        %540 = vst.msk [vmem:[#allocation2 + $0x1] sm:$0xff] %vm203, %v538
        %541 = vst.msk [vmem:[#allocation2 + $0x9] sm:$0xff] %vm203, %v539
        %v542 = vld [vmem:[#allocation2] sm:$0xff]
        %v543 = vld [vmem:[#allocation2 + $0x8] sm:$0xff]
        %v544 = vld [vmem:[#allocation2 + $0x1] sm:$0xff]
        %v545 = vld [vmem:[#allocation2 + $0x9] sm:$0xff]
        %v547 = vsel %vm203, %v544, 0
        %v550 = vsel %vm203, %v545, 0
        %552 = vmatprep.subr.mxu0 0.0
        %553 = vmatpush1.msra.mxu0 %v247
        %554 = vmatprep.subr.mxu0 0.0
        %555 = vmatpush1.msra.mxu0 0.0
        %556 = vmatprep.subr.mxu0 0.0
        %557 = vmatpush1.msra.mxu0 0.0
        %558 = vmatprep.subr.mxu0 0.0
        %559 = vmatpush1.msra.mxu0 0.0
        %560 = vmatprep.subr.mxu0 0.0
        %561 = vmatpush1.msra.mxu0 0.0
        %562 = vmatprep.subr.mxu0 0.0
        %563 = vmatpush1.msra.mxu0 0.0
        %564 = vmatprep.subr.mxu0 0.0
        %565 = vmatpush1.msra.mxu0 0.0
        %566 = vmatprep.subr.mxu0 0.0
        %567 = vmatpush1.msra.mxu0 0.0
        %568 = vmatprep.subr.mxu0 0.0
        %569 = vmatpush1.msra.mxu0 0.0
        %570 = vmatprep.subr.mxu0 0.0
        %571 = vmatpush1.msra.mxu0 0.0
        %572 = vmatprep.subr.mxu0 0.0
        %573 = vmatpush1.msra.mxu0 0.0
        %574 = vmatprep.subr.mxu0 0.0
        %575 = vmatpush1.msra.mxu0 0.0
        %576 = vmatprep.subr.mxu0 0.0
        %577 = vmatpush1.msra.mxu0 0.0
        %578 = vmatprep.subr.mxu0 0.0
        %579 = vmatpush1.msra.mxu0 0.0
        %580 = vmatprep.subr.mxu0 0.0
        %581 = vmatpush1.msra.mxu0 0.0
        %582 = vmatprep.subr.mxu0 0.0
        %583 = vmatpush1.msra.mxu0 0.0
        %584 = vmatprep.subr.mxu0 0.0
        %585 = vmatpush1.msra.mxu0 0.0
        %586 = vmatprep.subr.mxu0 0.0
        %587 = vmatpush1.msra.mxu0 0.0
        %588 = vmatprep.subr.mxu0 0.0
        %589 = vmatpush1.msra.mxu0 0.0
        %590 = vmatprep.subr.mxu0 0.0
        %591 = vmatpush1.msra.mxu0 0.0
        %592 = vmatprep.subr.mxu0 0.0
        %593 = vmatpush1.msra.mxu0 0.0
        %594 = vmatprep.subr.mxu0 0.0
        %595 = vmatpush1.msra.mxu0 0.0
        %596 = vmatprep.subr.mxu0 0.0
        %597 = vmatpush1.msra.mxu0 0.0
        %598 = vmatprep.subr.mxu0 0.0
        %599 = vmatpush1.msra.mxu0 0.0
        %600 = vmatprep.subr.mxu0 0.0
        %601 = vmatpush1.msra.mxu0 0.0
        %602 = vmatprep.subr.mxu0 0.0
        %603 = vmatpush1.msra.mxu0 0.0
        %604 = vmatprep.subr.mxu0 0.0
        %605 = vmatpush1.msra.mxu0 0.0
        %606 = vmatprep.subr.mxu0 0.0
        %607 = vmatpush1.msra.mxu0 0.0
        %608 = vmatprep.subr.mxu0 0.0
        %609 = vmatpush1.msra.mxu0 0.0
        %610 = vmatprep.subr.mxu0 0.0
        %611 = vmatpush1.msra.mxu0 0.0
        %612 = vmatprep.subr.mxu0 0.0
        %613 = vmatpush1.msra.mxu0 0.0
        %614 = vmatprep.subr.mxu0 0.0
        %615 = vmatpush1.msra.mxu0 0.0
        %616 = vmatprep.mubr.f32.mxu0 0.0
        %617 = vmatmul.mubr.f32.gmra.mrb[0].mxu0 %v547
        %v618 = vpop.f32.mrb[0].mxu0
        %v619 = vadd.f32 0.0, %v618
        %v620 = vpop.f32.mrb[0].mxu0
        %621 = vmatprep.mubr.f32.mxu0 0.0
        %622 = vmatmul.mubr.f32.gmra.mrb[0].mxu0 %v550
        %v623 = vpop.f32.mrb[0].mxu0
        %v624 = vadd.f32 0.0, %v623
        %v625 = vpop.f32.mrb[0].mxu0
        %626 = vdwg.mxu0
        %v628 = vsel %vm203, %v542, 0
        %v631 = vsel %vm203, %v543, 0
        %633 = vmatprep.subr.mxu0 0.0
        %634 = vmatpush1.msra.mxu0 %v245
        %635 = vmatprep.subr.mxu0 0.0
        %636 = vmatpush1.msra.mxu0 0.0
        %637 = vmatprep.subr.mxu0 0.0
        %638 = vmatpush1.msra.mxu0 0.0
        %639 = vmatprep.subr.mxu0 0.0
        %640 = vmatpush1.msra.mxu0 0.0
        %641 = vmatprep.subr.mxu0 0.0
        %642 = vmatpush1.msra.mxu0 0.0
        %643 = vmatprep.subr.mxu0 0.0
        %644 = vmatpush1.msra.mxu0 0.0
        %645 = vmatprep.subr.mxu0 0.0
        %646 = vmatpush1.msra.mxu0 0.0
        %647 = vmatprep.subr.mxu0 0.0
        %648 = vmatpush1.msra.mxu0 0.0
        %649 = vmatprep.subr.mxu0 0.0
        %650 = vmatpush1.msra.mxu0 0.0
        %651 = vmatprep.subr.mxu0 0.0
        %652 = vmatpush1.msra.mxu0 0.0
        %653 = vmatprep.subr.mxu0 0.0
        %654 = vmatpush1.msra.mxu0 0.0
        %655 = vmatprep.subr.mxu0 0.0
        %656 = vmatpush1.msra.mxu0 0.0
        %657 = vmatprep.subr.mxu0 0.0
        %658 = vmatpush1.msra.mxu0 0.0
        %659 = vmatprep.subr.mxu0 0.0
        %660 = vmatpush1.msra.mxu0 0.0
        %661 = vmatprep.subr.mxu0 0.0
        %662 = vmatpush1.msra.mxu0 0.0
        %663 = vmatprep.subr.mxu0 0.0
        %664 = vmatpush1.msra.mxu0 0.0
        %665 = vmatprep.subr.mxu0 0.0
        %666 = vmatpush1.msra.mxu0 0.0
        %667 = vmatprep.subr.mxu0 0.0
        %668 = vmatpush1.msra.mxu0 0.0
        %669 = vmatprep.subr.mxu0 0.0
        %670 = vmatpush1.msra.mxu0 0.0
        %671 = vmatprep.subr.mxu0 0.0
        %672 = vmatpush1.msra.mxu0 0.0
        %673 = vmatprep.subr.mxu0 0.0
        %674 = vmatpush1.msra.mxu0 0.0
        %675 = vmatprep.subr.mxu0 0.0
        %676 = vmatpush1.msra.mxu0 0.0
        %677 = vmatprep.subr.mxu0 0.0
        %678 = vmatpush1.msra.mxu0 0.0
        %679 = vmatprep.subr.mxu0 0.0
        %680 = vmatpush1.msra.mxu0 0.0
        %681 = vmatprep.subr.mxu0 0.0
        %682 = vmatpush1.msra.mxu0 0.0
        %683 = vmatprep.subr.mxu0 0.0
        %684 = vmatpush1.msra.mxu0 0.0
        %685 = vmatprep.subr.mxu0 0.0
        %686 = vmatpush1.msra.mxu0 0.0
        %687 = vmatprep.subr.mxu0 0.0
        %688 = vmatpush1.msra.mxu0 0.0
        %689 = vmatprep.subr.mxu0 0.0
        %690 = vmatpush1.msra.mxu0 0.0
        %691 = vmatprep.subr.mxu0 0.0
        %692 = vmatpush1.msra.mxu0 0.0
        %693 = vmatprep.subr.mxu0 0.0
        %694 = vmatpush1.msra.mxu0 0.0
        %695 = vmatprep.subr.mxu0 0.0
        %696 = vmatpush1.msra.mxu0 0.0
        %697 = vmatprep.mubr.f32.mxu0 0.0
        %698 = vmatmul.mubr.f32.gmra.mrb[0].mxu0 %v628
        %v699 = vpop.f32.mrb[0].mxu0
        %v700 = vadd.f32 %v619, %v699
        %v701 = vpop.f32.mrb[0].mxu0
        %702 = vmatprep.mubr.f32.mxu0 0.0
        %703 = vmatmul.mubr.f32.gmra.mrb[0].mxu0 %v631
        %v704 = vpop.f32.mrb[0].mxu0
        %v705 = vadd.f32 %v624, %v704
        %v706 = vpop.f32.mrb[0].mxu0
        %707 = vdwg.mxu0
        %v708 = vld [vmem:[#allocation2 + $0x2] sm:$0xff]
        %v709 = vld [vmem:[#allocation2 + $0xa] sm:$0xff]
        %v711 = vsel %vm203, %v708, 0
        %v714 = vsel %vm203, %v709, 0
        %716 = vmatprep.subr.mxu0 0.0
        %717 = vmatpush1.msra.mxu0 %v249
        %718 = vmatprep.subr.mxu0 0.0
        %719 = vmatpush1.msra.mxu0 0.0
        %720 = vmatprep.subr.mxu0 0.0
        %721 = vmatpush1.msra.mxu0 0.0
        %722 = vmatprep.subr.mxu0 0.0
        %723 = vmatpush1.msra.mxu0 0.0
        %724 = vmatprep.subr.mxu0 0.0
        %725 = vmatpush1.msra.mxu0 0.0
        %726 = vmatprep.subr.mxu0 0.0
        %727 = vmatpush1.msra.mxu0 0.0
        %728 = vmatprep.subr.mxu0 0.0
        %729 = vmatpush1.msra.mxu0 0.0
        %730 = vmatprep.subr.mxu0 0.0
        %731 = vmatpush1.msra.mxu0 0.0
        %732 = vmatprep.subr.mxu0 0.0
        %733 = vmatpush1.msra.mxu0 0.0
        %734 = vmatprep.subr.mxu0 0.0
        %735 = vmatpush1.msra.mxu0 0.0
        %736 = vmatprep.subr.mxu0 0.0
        %737 = vmatpush1.msra.mxu0 0.0
        %738 = vmatprep.subr.mxu0 0.0
        %739 = vmatpush1.msra.mxu0 0.0
        %740 = vmatprep.subr.mxu0 0.0
        %741 = vmatpush1.msra.mxu0 0.0
        %742 = vmatprep.subr.mxu0 0.0
        %743 = vmatpush1.msra.mxu0 0.0
        %744 = vmatprep.subr.mxu0 0.0
        %745 = vmatpush1.msra.mxu0 0.0
        %746 = vmatprep.subr.mxu0 0.0
        %747 = vmatpush1.msra.mxu0 0.0
        %748 = vmatprep.subr.mxu0 0.0
        %749 = vmatpush1.msra.mxu0 0.0
        %750 = vmatprep.subr.mxu0 0.0
        %751 = vmatpush1.msra.mxu0 0.0
        %752 = vmatprep.subr.mxu0 0.0
        %753 = vmatpush1.msra.mxu0 0.0
        %754 = vmatprep.subr.mxu0 0.0
        %755 = vmatpush1.msra.mxu0 0.0
        %756 = vmatprep.subr.mxu0 0.0
        %757 = vmatpush1.msra.mxu0 0.0
        %758 = vmatprep.subr.mxu0 0.0
        %759 = vmatpush1.msra.mxu0 0.0
        %760 = vmatprep.subr.mxu0 0.0
        %761 = vmatpush1.msra.mxu0 0.0
        %762 = vmatprep.subr.mxu0 0.0
        %763 = vmatpush1.msra.mxu0 0.0
        %764 = vmatprep.subr.mxu0 0.0
        %765 = vmatpush1.msra.mxu0 0.0
        %766 = vmatprep.subr.mxu0 0.0
        %767 = vmatpush1.msra.mxu0 0.0
        %768 = vmatprep.subr.mxu0 0.0
        %769 = vmatpush1.msra.mxu0 0.0
        %770 = vmatprep.subr.mxu0 0.0
        %771 = vmatpush1.msra.mxu0 0.0
        %772 = vmatprep.subr.mxu0 0.0
        %773 = vmatpush1.msra.mxu0 0.0
        %774 = vmatprep.subr.mxu0 0.0
        %775 = vmatpush1.msra.mxu0 0.0
        %776 = vmatprep.subr.mxu0 0.0
        %777 = vmatpush1.msra.mxu0 0.0
        %778 = vmatprep.subr.mxu0 0.0
        %779 = vmatpush1.msra.mxu0 0.0
        %780 = vmatprep.mubr.f32.mxu0 0.0
        %781 = vmatmul.mubr.f32.gmra.mrb[0].mxu0 %v711
        %v782 = vpop.f32.mrb[0].mxu0
        %v783 = vadd.f32 0.0, %v782
        %v784 = vpop.f32.mrb[0].mxu0
        %785 = vmatprep.mubr.f32.mxu0 0.0
        %786 = vmatmul.mubr.f32.gmra.mrb[0].mxu0 %v714
        %v787 = vpop.f32.mrb[0].mxu0
        %v788 = vadd.f32 0.0, %v787
        %v789 = vpop.f32.mrb[0].mxu0
        %790 = vdwg.mxu0
        %v791 = vadd.f32 %v700, %v783
        %v792 = vadd.f32 %v705, %v788
        %v793 = vmax.f32 %v791, 0.0
        %v794 = vmax.f32 %v792, 0.0
        %v795 = vadd.f32 %v533, %v793
        %v796 = vadd.f32 %v534, %v794
        %797 = vst.msk [vmem:[%s532] sm:$0xff] %vm203, %v795
        %798 = vst.msk [vmem:[%s532 + $0x8] sm:$0xff] %vm203, %v796
      $region44: #{scnn_forward.2} parent=31 // loop_footer
        %s529 = sadd.s32 1, %s525
      $region45: #{scnn_forward.2} parent=31 // loop_footer_branch
        %524 = sbr.rel target = $region41
      $region46: #{scnn_forward.2} parent=31 // loop_exit
        _
      %p799 = scmp.lt.s32.totalorder %s14, 1
      %s800 = scalar_select %p799, %s14, 1
      %s801 = smul.addr %s800, 32
      %s802 = smul.addr %s801, 8
      %s803 = scalar_lea.vmem %s3, %s802
      // Predicated region
      $region47: #{scnn_forward.2} parent=31 // pred_check
        %p804 = pneg %p100
      $region48: #{scnn_forward.2} parent=31 // pred_check_branch
        %806 = sbr.rel (%p804) target = $region50
      $region49: #{scnn_forward.2} parent=31 // pred_region
        _
      $region50: #{scnn_forward.2} parent=31 // pred_fallthru
        _
    $region32: #{scnn_forward.2} parent=5 // pred_fallthru
      _
    %p807 = scmp.le.s32.totalorder 2, %s9
    // Predicated region
    $region51: #{scnn_forward.2} parent=5 // pred_check
      %p808 = pneg %p807
    $region52: #{scnn_forward.2} parent=5 // pred_check_branch
      %810 = sbr.rel (%p808) target = $region54
    $region53: #{scnn_forward.2} parent=5 // pred_region
      %s811 = ssub.s32 %s9, 2
      // Predicated region
      $region55: #{scnn_forward.2} parent=53 // pred_check
        %p812 = pneg %p106
      $region56: #{scnn_forward.2} parent=53 // pred_check_branch
        %814 = sbr.rel (%p812) target = $region58
      $region57: #{scnn_forward.2} parent=53 // pred_region
        %p815 = scmp.lt.s32.totalorder %s15, 1
        %s816 = scalar_select %p815, %s15, 1
        %s817 = smul.addr %s816, 32
        %s818 = smul.addr %s817, 8
        %s819 = scalar_lea.vmem %s3, %s818
      $region58: #{scnn_forward.2} parent=53 // pred_fallthru
        _
    $region54: #{scnn_forward.2} parent=5 // pred_fallthru
      _
  $region6: #{scnn_forward.2} parent=0 // loop_footer
    %s13 = sadd.s32 1, %s9
  $region7: #{scnn_forward.2} parent=0 // loop_footer_branch
    %8 = sbr.rel target = $region3
  $region8: #{scnn_forward.2} parent=0 // loop_exit
    _

</llo_original>
